<compile_context>
chip_gen: v7x
topology: tpu7x:2x2x1
jax: 0.10.0
libtpu: 0.0.40
codegen_flags: <defaults>
</compile_context>

<pallas_src>
import math
import functools

import jax
import jax.numpy as jnp
from jax.experimental import pallas as pl
from jax.experimental.pallas import tpu as pltpu


def _round_up(x, mult):
    return ((x + mult - 1) // mult) * mult


def _pad_axis(a, axis, target):
    cur = a.shape[axis]
    if cur == target:
        return a
    pad = [(0, 0)] * a.ndim
    pad[axis] = (0, target - cur)
    return jnp.pad(a, pad)


# ----------------------------------------------------------------------------
# Kernel
# ----------------------------------------------------------------------------
def _deep_sub_output_kernel(x_ref, orig_ref, w1_ref, b1_ref, w2_ref, b2_ref,
                            gamma_ref, beta_ref, o_ref, *,
                            eps, compute_dtype, approx_gelu):
    # ---- l1: Linear(input_dim -> inner_rank), f32 accumulation on the MXU ----
    x = x_ref[...].astype(compute_dtype)
    w1 = w1_ref[...].astype(compute_dtype)
    h = jnp.dot(x, w1, preferred_element_type=jnp.float32)
    h = h + b1_ref[...].astype(jnp.float32)

    # ---- GELU (exact erf by default, matching torch.nn.GELU) ----
    if approx_gelu:
        # tanh form goes to the EUP (separate VLIW slot), relieving the VALU.
        c = math.sqrt(2.0 / math.pi)
        h = 0.5 * h * (1.0 + jnp.tanh(c * (h + 0.044715 * h * h * h)))
    else:
        h = 0.5 * h * (1.0 + jax.lax.erf(h * (1.0 / math.sqrt(2.0))))

    # ---- l2: Linear(inner_rank -> output_dim) ----
    w2 = w2_ref[...].astype(compute_dtype)
    y = jnp.dot(h.astype(compute_dtype), w2, preferred_element_type=jnp.float32)
    y = y + b2_ref[...].astype(jnp.float32)

    # ---- residual add ----
    z = y + orig_ref[...].astype(jnp.float32)

    # ---- LayerNorm over the true (unpadded) output_dim ----
    d = z.shape[-1]
    inv_d = 1.0 / float(d)
    mean = jnp.sum(z, axis=-1, keepdims=True) * inv_d
    centered = z - mean
    var = jnp.sum(centered * centered, axis=-1, keepdims=True) * inv_d
    zn = centered * jax.lax.rsqrt(var + eps)

    out = zn * gamma_ref[...].astype(jnp.float32) + beta_ref[...].astype(jnp.float32)
    o_ref[...] = out.astype(o_ref.dtype)


# ----------------------------------------------------------------------------
# One-time parameter preparation (padding hoisted out of the per-call path)
# ----------------------------------------------------------------------------
def prepare_params(params, *, lane=128):
    """Pad inner_rank to a lane multiple once; reshape 1-D params to (1, D)."""
    w1, b1, w2, b2 = params["w1"], params["b1"], params["w2"], params["b2"]
    gamma, beta = params["ln_gamma"], params["ln_beta"]

    input_dim, inner_rank = w1.shape
    output_dim = w2.shape[1]
    r_p = _round_up(inner_rank, lane)

    prepared = {
        "w1": _pad_axis(w1, 1, r_p),                        # (input_dim, r_p)
        "b1": _pad_axis(b1.reshape(1, -1), 1, r_p),         # (1, r_p)
        "w2": _pad_axis(w2, 0, r_p),                        # (r_p, output_dim)
        "b2": b2.reshape(1, -1),                            # (1, output_dim)
        "ln_gamma": gamma.reshape(1, -1),                   # (1, output_dim)
        "ln_beta": beta.reshape(1, -1),                     # (1, output_dim)
    }
    dims = (input_dim, inner_rank, output_dim, r_p)
    return prepared, dims


# ----------------------------------------------------------------------------
# Wrapper
# ----------------------------------------------------------------------------
def deep_sub_output(x, orig_input, prepared, dims, *, eps=1e-5,
                    tm_max=1024, vmem_budget_bytes=40 << 20,
                    compute_dtype=None, approx_gelu=False):
    """x: (..., input_dim), orig_input: (..., output_dim) -> (..., output_dim)."""
    input_dim, _inner_rank, output_dim, r_p = dims
    if compute_dtype is None:
        compute_dtype = x.dtype

    lead = x.shape[:-1]
    m = 1
    for d in lead:
        m *= d

    x2 = x.reshape(m, input_dim)
    orig2 = orig_input.reshape(m, output_dim)

    in_isz = jnp.dtype(x.dtype).itemsize
    out_isz = in_isz
    param_isz = 4

    # ---- VMEM budgeting: resident weights (assumed double-buffered) +
    #      double-buffered streamed tiles + f32 intermediates ----
    weight_bytes = 2 * param_isz * (input_dim * r_p + r_p * output_dim
                                    + r_p + 3 * output_dim)
    per_row = 2 * ((input_dim + output_dim) * in_isz + output_dim * out_isz)
    per_row += 4 * (r_p + 2 * output_dim)            # h, y/z f32 intermediates
    avail = max(vmem_budget_bytes - weight_bytes, per_row * 8)

    m8 = _round_up(max(m, 1), 8)
    tm = max(8, min(tm_max, (avail // per_row) // 8 * 8))
    tm = min(tm, m8)
    # Megacore / pipelining: aim for >= 4 grid steps when M allows.
    tm_for_steps = _round_up(max(pl.cdiv(m, 4), 1), 8)
    tm = max(8, min(tm, tm_for_steps))

    grid = (pl.cdiv(m, tm),)

    used_bytes = (weight_bytes
                  + 2 * tm * ((input_dim + output_dim) * in_isz
                              + output_dim * out_isz)
                  + tm * 4 * (r_p + 2 * output_dim))
    vmem_limit = int(min(max(used_bytes + (4 << 20), 16 << 20), 56 << 20))

    tiled = lambda shape: pl.BlockSpec(shape, lambda i: (i, 0))
    resident = lambda shape: pl.BlockSpec(shape, lambda i: (0, 0))

    cost = pl.CostEstimate(
        flops=2 * m * (input_dim * r_p + r_p * output_dim) + 10 * m * output_dim,
        transcendentals=m * r_p,
        bytes_accessed=(m * (input_dim * in_isz + output_dim * in_isz
                             + output_dim * out_isz)
                        + (input_dim * r_p + r_p * output_dim
                           + r_p + 3 * output_dim) * param_isz),
    )

    out2 = pl.pallas_call(
        functools.partial(_deep_sub_output_kernel, eps=eps,
                          compute_dtype=compute_dtype, approx_gelu=approx_gelu),
        out_shape=jax.ShapeDtypeStruct((m, output_dim), x.dtype),
        grid=grid,
        in_specs=[
            tiled((tm, input_dim)),          # x tile (full-dim feature block)
            tiled((tm, output_dim)),         # residual tile
            resident((input_dim, r_p)),      # w1 (VMEM-resident)
            resident((1, r_p)),              # b1
            resident((r_p, output_dim)),     # w2
            resident((1, output_dim)),       # b2
            resident((1, output_dim)),       # ln gamma
            resident((1, output_dim)),       # ln beta
        ],
        out_specs=tiled((tm, output_dim)),
        compiler_params=pltpu.CompilerParams(
            dimension_semantics=("parallel",),
            vmem_limit_bytes=vmem_limit),
        cost_estimate=cost,
    )(x2, orig2, prepared["w1"], prepared["b1"], prepared["w2"],
      prepared["b2"], prepared["ln_gamma"], prepared["ln_beta"])

    return out2.reshape(*lead, output_dim)


# ----------------------------------------------------------------------------
# Synthetic params (nn.Linear / nn.LayerNorm shapes; weights pre-transposed)
# ----------------------------------------------------------------------------
def init_params(key, input_dim, inner_rank, output_dim):
    k1, k2, k3, k4 = jax.random.split(key, 4)
    lim1 = 1.0 / math.sqrt(input_dim)
    lim2 = 1.0 / math.sqrt(inner_rank)
    return {
        "w1": jax.random.uniform(k1, (input_dim, inner_rank), jnp.float32, -lim1, lim1),
        "b1": jax.random.uniform(k2, (inner_rank,), jnp.float32, -lim1, lim1),
        "w2": jax.random.uniform(k3, (inner_rank, output_dim), jnp.float32, -lim2, lim2),
        "b2": jax.random.uniform(k4, (output_dim,), jnp.float32, -lim2, lim2),
        "ln_gamma": jnp.ones((output_dim,), jnp.float32),
        "ln_beta": jnp.zeros((output_dim,), jnp.float32),
    }


if __name__ == "__main__":
    batch, seq = 2, 8
    input_dim, inner_rank, output_dim = 48, 16, 32

    key = jax.random.PRNGKey(0)
    kp, kx, ko = jax.random.split(key, 3)

    params = init_params(kp, input_dim, inner_rank, output_dim)
    prepared, dims = prepare_params(params)          # pad once, reuse per call

    x = jax.random.normal(kx, (batch, seq, input_dim), jnp.float32)
    orig_input = jax.random.normal(ko, (batch, seq, output_dim), jnp.float32)

    out = deep_sub_output(x, orig_input, prepared, dims)
    jax.block_until_ready(out)

    # Pure-JAX reference (torch.nn.GELU exact erf, torch.nn.LayerNorm biased
    # variance, eps inside rsqrt).
    h = x @ params["w1"] + params["b1"]
    h = 0.5 * h * (1.0 + jax.lax.erf(h / math.sqrt(2.0)))
    y = h @ params["w2"] + params["b2"]
    z = y + orig_input
    mean = jnp.mean(z, axis=-1, keepdims=True)
    var = jnp.mean(jnp.square(z - mean), axis=-1, keepdims=True)
    ref = (z - mean) * jax.lax.rsqrt(var + 1e-5) * params["ln_gamma"] + params["ln_beta"]

    assert out.shape == (batch, seq, output_dim)
    assert jnp.allclose(out, ref, atol=1e-5, rtol=1e-5)
    print("KERNEL_OK")
</pallas_src>

<mosaic_0001>
module attributes {stable_mosaic.version = 11 : i64} {
  func.func @_deep_sub_output_kernel(%arg0: i32, %arg1: memref<8x48xf32, #tpu.memory_space<vmem>>, %arg2: memref<8x32xf32, #tpu.memory_space<vmem>>, %arg3: memref<48x128xf32, #tpu.memory_space<vmem>>, %arg4: memref<1x128xf32, #tpu.memory_space<vmem>>, %arg5: memref<128x32xf32, #tpu.memory_space<vmem>>, %arg6: memref<1x32xf32, #tpu.memory_space<vmem>>, %arg7: memref<1x32xf32, #tpu.memory_space<vmem>>, %arg8: memref<1x32xf32, #tpu.memory_space<vmem>>, %arg9: memref<8x32xf32, #tpu.memory_space<vmem>>) attributes {dimension_semantics = [#tpu.dimension_semantics<parallel>], iteration_bounds = array<i64: 2>, scalar_prefetch = 0 : i64, scratch_operands = 0 : i64, tpu.core_type = #tpu.core_type<tc>, window_params = [{transform_indices = @transform_0, window_bounds = array<i64: 8, 48>}, {transform_indices = @transform_1, window_bounds = array<i64: 8, 32>}, {pipeline_mode = #tpu.pipeline_mode<synchronous>, transform_indices = @transform_2, window_bounds = array<i64: 48, 128>}, {pipeline_mode = #tpu.pipeline_mode<synchronous>, transform_indices = @transform_3, window_bounds = array<i64: 1, 128>}, {pipeline_mode = #tpu.pipeline_mode<synchronous>, transform_indices = @transform_4, window_bounds = array<i64: 128, 32>}, {pipeline_mode = #tpu.pipeline_mode<synchronous>, transform_indices = @transform_5, window_bounds = array<i64: 1, 32>}, {pipeline_mode = #tpu.pipeline_mode<synchronous>, transform_indices = @transform_6, window_bounds = array<i64: 1, 32>}, {pipeline_mode = #tpu.pipeline_mode<synchronous>, transform_indices = @transform_7, window_bounds = array<i64: 1, 32>}, {transform_indices = @transform_8, window_bounds = array<i64: 8, 32>}]} {
    %c0 = arith.constant 0 : index
    %c0_0 = arith.constant 0 : index
    %0 = vector.load %arg1[%c0, %c0_0] : memref<8x48xf32, #tpu.memory_space<vmem>>, vector<8x48xf32>
    %c0_1 = arith.constant 0 : index
    %c0_2 = arith.constant 0 : index
    %1 = vector.load %arg3[%c0_1, %c0_2] : memref<48x128xf32, #tpu.memory_space<vmem>>, vector<48x128xf32>
    %cst = arith.constant dense<0.000000e+00> : vector<8x128xf32>
    %2 = tpu.matmul %0, %1, %cst {dimension_numbers = #tpu.dot_dimension_numbers<[1], [0], [0], [1], [0, 0, 1, 1], [], []>} : vector<8x48xf32>, vector<48x128xf32>, vector<8x128xf32> -> vector<8x128xf32>
    %c0_3 = arith.constant 0 : index
    %c0_4 = arith.constant 0 : index
    %3 = vector.load %arg4[%c0_3, %c0_4] : memref<1x128xf32, #tpu.memory_space<vmem>>, vector<1x128xf32>
    %4 = vector.broadcast %3 : vector<1x128xf32> to vector<8x128xf32>
    %5 = arith.addf %2, %4 : vector<8x128xf32>
    %cst_5 = arith.constant 5.000000e-01 : f32
    %6 = vector.broadcast %cst_5 : f32 to vector<8x128xf32>
    %7 = arith.mulf %6, %5 : vector<8x128xf32>
    %cst_6 = arith.constant 0.707106769 : f32
    %8 = vector.broadcast %cst_6 : f32 to vector<8x128xf32>
    %9 = arith.mulf %5, %8 : vector<8x128xf32>
    %10 = math.erf %9 : vector<8x128xf32>
    %cst_7 = arith.constant 1.000000e+00 : f32
    %11 = vector.broadcast %cst_7 : f32 to vector<8x128xf32>
    %12 = arith.addf %11, %10 : vector<8x128xf32>
    %13 = arith.mulf %7, %12 : vector<8x128xf32>
    %c0_8 = arith.constant 0 : index
    %c0_9 = arith.constant 0 : index
    %14 = vector.load %arg5[%c0_8, %c0_9] : memref<128x32xf32, #tpu.memory_space<vmem>>, vector<128x32xf32>
    %cst_10 = arith.constant dense<0.000000e+00> : vector<8x32xf32>
    %15 = tpu.matmul %13, %14, %cst_10 {dimension_numbers = #tpu.dot_dimension_numbers<[1], [0], [0], [1], [0, 0, 1, 1], [], []>} : vector<8x128xf32>, vector<128x32xf32>, vector<8x32xf32> -> vector<8x32xf32>
    %c0_11 = arith.constant 0 : index
    %c0_12 = arith.constant 0 : index
    %16 = vector.load %arg6[%c0_11, %c0_12] : memref<1x32xf32, #tpu.memory_space<vmem>>, vector<1x32xf32>
    %17 = vector.broadcast %16 : vector<1x32xf32> to vector<8x32xf32>
    %18 = arith.addf %15, %17 : vector<8x32xf32>
    %c0_13 = arith.constant 0 : index
    %c0_14 = arith.constant 0 : index
    %19 = vector.load %arg2[%c0_13, %c0_14] : memref<8x32xf32, #tpu.memory_space<vmem>>, vector<8x32xf32>
    %20 = arith.addf %18, %19 : vector<8x32xf32>
    %cst_15 = arith.constant dense<0.000000e+00> : vector<8xf32>
    %21 = vector.multi_reduction <add>, %20, %cst_15 [1] : vector<8x32xf32> to vector<8xf32>
    %22 = vector.shape_cast %21 : vector<8xf32> to vector<8x1xf32>
    %cst_16 = arith.constant 3.125000e-02 : f32
    %23 = vector.broadcast %cst_16 : f32 to vector<8x1xf32>
    %24 = arith.mulf %22, %23 : vector<8x1xf32>
    %25 = vector.broadcast %24 : vector<8x1xf32> to vector<8x32xf32>
    %26 = arith.subf %20, %25 : vector<8x32xf32>
    %27 = arith.mulf %26, %26 : vector<8x32xf32>
    %cst_17 = arith.constant dense<0.000000e+00> : vector<8xf32>
    %28 = vector.multi_reduction <add>, %27, %cst_17 [1] : vector<8x32xf32> to vector<8xf32>
    %29 = vector.shape_cast %28 : vector<8xf32> to vector<8x1xf32>
    %cst_18 = arith.constant 3.125000e-02 : f32
    %30 = vector.broadcast %cst_18 : f32 to vector<8x1xf32>
    %31 = arith.mulf %29, %30 : vector<8x1xf32>
    %cst_19 = arith.constant 9.99999974E-6 : f32
    %32 = vector.broadcast %cst_19 : f32 to vector<8x1xf32>
    %33 = arith.addf %31, %32 : vector<8x1xf32>
    %34 = math.rsqrt %33 : vector<8x1xf32>
    %35 = vector.broadcast %34 : vector<8x1xf32> to vector<8x32xf32>
    %36 = arith.mulf %26, %35 : vector<8x32xf32>
    %c0_20 = arith.constant 0 : index
    %c0_21 = arith.constant 0 : index
    %37 = vector.load %arg7[%c0_20, %c0_21] : memref<1x32xf32, #tpu.memory_space<vmem>>, vector<1x32xf32>
    %38 = vector.broadcast %37 : vector<1x32xf32> to vector<8x32xf32>
    %39 = arith.mulf %36, %38 : vector<8x32xf32>
    %c0_22 = arith.constant 0 : index
    %c0_23 = arith.constant 0 : index
    %40 = vector.load %arg8[%c0_22, %c0_23] : memref<1x32xf32, #tpu.memory_space<vmem>>, vector<1x32xf32>
    %41 = vector.broadcast %40 : vector<1x32xf32> to vector<8x32xf32>
    %42 = arith.addf %39, %41 : vector<8x32xf32>
    %c0_24 = arith.constant 0 : index
    %c0_25 = arith.constant 0 : index
    %43 = vector.load %arg9[%c0_24, %c0_25] : memref<8x32xf32, #tpu.memory_space<vmem>>, vector<8x32xf32>
    tpu.vector_store %arg9[%c0_24, %c0_25], %42 {strides = array<i32>} : memref<8x32xf32, #tpu.memory_space<vmem>>, vector<8x32xf32>,
    return
  }
  func.func @transform_0(%arg0: i32) -> (i32, i32) {
    %c0_i32 = arith.constant 0 : i32
    %c0_i32_0 = arith.constant 0 : i32
    return %arg0, %c0_i32 : i32, i32
  }
  func.func @transform_1(%arg0: i32) -> (i32, i32) {
    %c0_i32 = arith.constant 0 : i32
    %c0_i32_0 = arith.constant 0 : i32
    return %arg0, %c0_i32 : i32, i32
  }
  func.func @transform_2(%arg0: i32) -> (i32, i32) {
    %c0_i32 = arith.constant 0 : i32
    %c0_i32_0 = arith.constant 0 : i32
    %c0_i32_1 = arith.constant 0 : i32
    return %c0_i32, %c0_i32_0 : i32, i32
  }
  func.func @transform_3(%arg0: i32) -> (i32, i32) {
    %c0_i32 = arith.constant 0 : i32
    %c0_i32_0 = arith.constant 0 : i32
    %c0_i32_1 = arith.constant 0 : i32
    return %c0_i32, %c0_i32_0 : i32, i32
  }
  func.func @transform_4(%arg0: i32) -> (i32, i32) {
    %c0_i32 = arith.constant 0 : i32
    %c0_i32_0 = arith.constant 0 : i32
    %c0_i32_1 = arith.constant 0 : i32
    return %c0_i32, %c0_i32_0 : i32, i32
  }
  func.func @transform_5(%arg0: i32) -> (i32, i32) {
    %c0_i32 = arith.constant 0 : i32
    %c0_i32_0 = arith.constant 0 : i32
    %c0_i32_1 = arith.constant 0 : i32
    return %c0_i32, %c0_i32_0 : i32, i32
  }
  func.func @transform_6(%arg0: i32) -> (i32, i32) {
    %c0_i32 = arith.constant 0 : i32
    %c0_i32_0 = arith.constant 0 : i32
    %c0_i32_1 = arith.constant 0 : i32
    return %c0_i32, %c0_i32_0 : i32, i32
  }
  func.func @transform_7(%arg0: i32) -> (i32, i32) {
    %c0_i32 = arith.constant 0 : i32
    %c0_i32_0 = arith.constant 0 : i32
    %c0_i32_1 = arith.constant 0 : i32
    return %c0_i32, %c0_i32_0 : i32, i32
  }
  func.func @transform_8(%arg0: i32) -> (i32, i32) {
    %c0_i32 = arith.constant 0 : i32
    %c0_i32_0 = arith.constant 0 : i32
    return %arg0, %c0_i32 : i32, i32
  }
}

</mosaic_0001>

<llo_original>
// kernel: tpu_custom_call.1
$region0: #{tpu_custom_call.1}
  #allocation0 [shape = 'u32[]', space=smem, size = 0x4, offset = 0x4, fixed_abs, tag = 'smem constant byte address 0x4 - core index']
  #allocation1 [shape = 'u32[144,128]{1,0:T(1,128)}', space=vmem, size = 0x12000, scoped, tag = 'internal scratch']
  %s0 = inlined_call_operand.vmem [shape: f32[16,48], index: 0, kind: input, shape index: {}]
  %s1 = inlined_call_operand.vmem [shape: f32[16,32], index: 1, kind: input, shape index: {}]
  %s2 = inlined_call_operand.vmem [shape: f32[48,128], index: 2, kind: input, shape index: {}]
  %s3 = inlined_call_operand.vmem [shape: f32[1,128], index: 3, kind: input, shape index: {}]
  %s4 = inlined_call_operand.vmem [shape: f32[128,32], index: 4, kind: input, shape index: {}]
  %s5 = inlined_call_operand.vmem [shape: f32[1,32], index: 5, kind: input, shape index: {}]
  %s6 = inlined_call_operand.vmem [shape: f32[1,32], index: 6, kind: input, shape index: {}]
  %s7 = inlined_call_operand.vmem [shape: f32[1,32], index: 7, kind: input, shape index: {}]
  %s8 = inlined_call_operand.hbm [shape: f32[16,32], index: 8, kind: output, shape index: {}]
  %s9 = sld [smem:[#allocation0]]
  $region65: #{tpu_custom_call.1} parent=0
    _
  %s11 = ssub.s32 1, %s9
  %s12 = scalar_select 0, %s11, %s9
  $region1: #{tpu_custom_call.1} parent=0
    #allocation2 [shape = 'u8[8192]{0}', space=vmem, size = 0x2000, scoped, tag = 'output window, operand 0']
    #allocation3 [shape = 's32[2]{0}', space=sflag, size = 0x8, scoped, tag = 'scoped memory for tpu_custom_call.1']
    %13 = vsyncpa [#allocation3], 0
    %s14 = scalar_lea.sflag [#allocation3], 1
    %15 = vsyncpa %s14, 0
    loop: start=0, step=1, limit=4
    $region2: #{tpu_custom_call.1} parent=1 // loop_pre_header
      _
    $region3: #{tpu_custom_call.1} parent=1 // loop_header
      %s17 = sphi 0, %s21
      %p18 = scmp.ge.s32.totalorder %s17, 4
      %s27 = sphi 0, %s29
      %s30 = sphi 0, %s27
      %s31 = sphi 0, %s30
      %s47 = sphi 0, %s31
      %s53 = sphi 0, %s55
      %s56 = sphi 0, %s53
      %s57 = sphi 0, %s56
      %s73 = sphi 0, %s57
      %s77 = sphi 0, %s77
      %s79 = sphi 0, %s77
      %s80 = sphi 0, %s79
      %s94 = sphi 0, %s80
      %s98 = sphi 0, %s98
      %s100 = sphi 0, %s98
      %s101 = sphi 0, %s100
      %s115 = sphi 0, %s101
      %s119 = sphi 0, %s119
      %s121 = sphi 0, %s119
      %s122 = sphi 0, %s121
      %s136 = sphi 0, %s122
      %s140 = sphi 0, %s140
      %s142 = sphi 0, %s140
      %s143 = sphi 0, %s142
      %s157 = sphi 0, %s143
      %s161 = sphi 0, %s161
      %s163 = sphi 0, %s161
      %s164 = sphi 0, %s163
      %s178 = sphi 0, %s164
      %s182 = sphi 0, %s182
      %s184 = sphi 0, %s182
      %s185 = sphi 0, %s184
      %s199 = sphi 0, %s185
      %s205 = sphi 0, %s207
      %s208 = sphi 0, %s205
      %s209 = sphi 0, %s208
      %s225 = sphi 0, %s209
    $region4: #{tpu_custom_call.1} parent=1 // loop_header_branch
      %20 = sbr.rel (%p18) target = $region8
    $region5: #{tpu_custom_call.1} parent=1 // loop_body
      %s22 = ssub.s32 %s17, 1
      %s23 = ssub.s32 %s17, 2
      %s24 = sadd.s32 %s17, 1
      %s25 = ssub.s32 %s17, %s24
      %p26 = scmp.eq.s32.totalorder %s25, 0
      %s28 = sadd.s32 %s27, 1
      %s29 = scalar_select %p26, %s27, %s28
      %p32 = pneg %p26
      %p33 = scmp.eq.s32.totalorder %s17, 1
      %p34 = por %p32, %p33
      %p35 = scmp.ne.s32.totalorder %s27, %s30
      %p36 = scmp.eq.s32.totalorder %s17, 0
      %p37 = por %p35, %p36
      %p38 = scmp.ne.s32.totalorder %s27, %s30
      %p39 = scmp.eq.s32.totalorder %s22, 1
      %p40 = por %p38, %p39
      %p41 = scmp.ne.s32.totalorder %s30, %s31
      %p42 = scmp.eq.s32.totalorder %s22, 0
      %p43 = por %p41, %p42
      %p44 = scmp.ne.s32.totalorder %s30, %s31
      %p45 = scmp.eq.s32.totalorder %s23, 1
      %p46 = por %p44, %p45
      %p48 = scmp.ne.s32.totalorder %s31, %s47
      %p49 = scmp.eq.s32.totalorder %s23, 0
      %p50 = por %p48, %p49
      %s51 = ssub.s32 %s17, %s24
      %p52 = scmp.eq.s32.totalorder %s51, 0
      %s54 = sadd.s32 %s53, 1
      %s55 = scalar_select %p52, %s53, %s54
      %p58 = pneg %p52
      %p59 = scmp.eq.s32.totalorder %s17, 1
      %p60 = por %p58, %p59
      %p61 = scmp.ne.s32.totalorder %s53, %s56
      %p62 = scmp.eq.s32.totalorder %s17, 0
      %p63 = por %p61, %p62
      %p64 = scmp.ne.s32.totalorder %s53, %s56
      %p65 = scmp.eq.s32.totalorder %s22, 1
      %p66 = por %p64, %p65
      %p67 = scmp.ne.s32.totalorder %s56, %s57
      %p68 = scmp.eq.s32.totalorder %s22, 0
      %p69 = por %p67, %p68
      %p70 = scmp.ne.s32.totalorder %s56, %s57
      %p71 = scmp.eq.s32.totalorder %s23, 1
      %p72 = por %p70, %p71
      %p74 = scmp.ne.s32.totalorder %s57, %s73
      %p75 = scmp.eq.s32.totalorder %s23, 0
      %p76 = por %p74, %p75
      %s78 = sadd.s32 %s77, 1
      %p81 = scmp.eq.s32.totalorder %s17, 1
      %p82 = scmp.ne.s32.totalorder %s77, %s79
      %p83 = scmp.eq.s32.totalorder %s17, 0
      %p84 = por %p82, %p83
      %p85 = scmp.ne.s32.totalorder %s77, %s79
      %p86 = scmp.eq.s32.totalorder %s22, 1
      %p87 = por %p85, %p86
      %p88 = scmp.ne.s32.totalorder %s79, %s80
      %p89 = scmp.eq.s32.totalorder %s22, 0
      %p90 = por %p88, %p89
      %p91 = scmp.ne.s32.totalorder %s79, %s80
      %p92 = scmp.eq.s32.totalorder %s23, 1
      %p93 = por %p91, %p92
      %p95 = scmp.ne.s32.totalorder %s80, %s94
      %p96 = scmp.eq.s32.totalorder %s23, 0
      %p97 = por %p95, %p96
      %s99 = sadd.s32 %s98, 1
      %p102 = scmp.eq.s32.totalorder %s17, 1
      %p103 = scmp.ne.s32.totalorder %s98, %s100
      %p104 = scmp.eq.s32.totalorder %s17, 0
      %p105 = por %p103, %p104
      %p106 = scmp.ne.s32.totalorder %s98, %s100
      %p107 = scmp.eq.s32.totalorder %s22, 1
      %p108 = por %p106, %p107
      %p109 = scmp.ne.s32.totalorder %s100, %s101
      %p110 = scmp.eq.s32.totalorder %s22, 0
      %p111 = por %p109, %p110
      %p112 = scmp.ne.s32.totalorder %s100, %s101
      %p113 = scmp.eq.s32.totalorder %s23, 1
      %p114 = por %p112, %p113
      %p116 = scmp.ne.s32.totalorder %s101, %s115
      %p117 = scmp.eq.s32.totalorder %s23, 0
      %p118 = por %p116, %p117
      %s120 = sadd.s32 %s119, 1
      %p123 = scmp.eq.s32.totalorder %s17, 1
      %p124 = scmp.ne.s32.totalorder %s119, %s121
      %p125 = scmp.eq.s32.totalorder %s17, 0
      %p126 = por %p124, %p125
      %p127 = scmp.ne.s32.totalorder %s119, %s121
      %p128 = scmp.eq.s32.totalorder %s22, 1
      %p129 = por %p127, %p128
      %p130 = scmp.ne.s32.totalorder %s121, %s122
      %p131 = scmp.eq.s32.totalorder %s22, 0
      %p132 = por %p130, %p131
      %p133 = scmp.ne.s32.totalorder %s121, %s122
      %p134 = scmp.eq.s32.totalorder %s23, 1
      %p135 = por %p133, %p134
      %p137 = scmp.ne.s32.totalorder %s122, %s136
      %p138 = scmp.eq.s32.totalorder %s23, 0
      %p139 = por %p137, %p138
      %s141 = sadd.s32 %s140, 1
      %p144 = scmp.eq.s32.totalorder %s17, 1
      %p145 = scmp.ne.s32.totalorder %s140, %s142
      %p146 = scmp.eq.s32.totalorder %s17, 0
      %p147 = por %p145, %p146
      %p148 = scmp.ne.s32.totalorder %s140, %s142
      %p149 = scmp.eq.s32.totalorder %s22, 1
      %p150 = por %p148, %p149
      %p151 = scmp.ne.s32.totalorder %s142, %s143
      %p152 = scmp.eq.s32.totalorder %s22, 0
      %p153 = por %p151, %p152
      %p154 = scmp.ne.s32.totalorder %s142, %s143
      %p155 = scmp.eq.s32.totalorder %s23, 1
      %p156 = por %p154, %p155
      %p158 = scmp.ne.s32.totalorder %s143, %s157
      %p159 = scmp.eq.s32.totalorder %s23, 0
      %p160 = por %p158, %p159
      %s162 = sadd.s32 %s161, 1
      %p165 = scmp.eq.s32.totalorder %s17, 1
      %p166 = scmp.ne.s32.totalorder %s161, %s163
      %p167 = scmp.eq.s32.totalorder %s17, 0
      %p168 = por %p166, %p167
      %p169 = scmp.ne.s32.totalorder %s161, %s163
      %p170 = scmp.eq.s32.totalorder %s22, 1
      %p171 = por %p169, %p170
      %p172 = scmp.ne.s32.totalorder %s163, %s164
      %p173 = scmp.eq.s32.totalorder %s22, 0
      %p174 = por %p172, %p173
      %p175 = scmp.ne.s32.totalorder %s163, %s164
      %p176 = scmp.eq.s32.totalorder %s23, 1
      %p177 = por %p175, %p176
      %p179 = scmp.ne.s32.totalorder %s164, %s178
      %p180 = scmp.eq.s32.totalorder %s23, 0
      %p181 = por %p179, %p180
      %s183 = sadd.s32 %s182, 1
      %p186 = scmp.eq.s32.totalorder %s17, 1
      %p187 = scmp.ne.s32.totalorder %s182, %s184
      %p188 = scmp.eq.s32.totalorder %s17, 0
      %p189 = por %p187, %p188
      %p190 = scmp.ne.s32.totalorder %s182, %s184
      %p191 = scmp.eq.s32.totalorder %s22, 1
      %p192 = por %p190, %p191
      %p193 = scmp.ne.s32.totalorder %s184, %s185
      %p194 = scmp.eq.s32.totalorder %s22, 0
      %p195 = por %p193, %p194
      %p196 = scmp.ne.s32.totalorder %s184, %s185
      %p197 = scmp.eq.s32.totalorder %s23, 1
      %p198 = por %p196, %p197
      %p200 = scmp.ne.s32.totalorder %s185, %s199
      %p201 = scmp.eq.s32.totalorder %s23, 0
      %p202 = por %p200, %p201
      %s203 = ssub.s32 %s17, %s24
      %p204 = scmp.eq.s32.totalorder %s203, 0
      %s206 = sadd.s32 %s205, 1
      %s207 = scalar_select %p204, %s205, %s206
      %p210 = pneg %p204
      %p211 = scmp.eq.s32.totalorder %s17, 1
      %p212 = por %p210, %p211
      %p213 = scmp.ne.s32.totalorder %s205, %s208
      %p214 = scmp.eq.s32.totalorder %s17, 0
      %p215 = por %p213, %p214
      %p216 = scmp.ne.s32.totalorder %s205, %s208
      %p217 = scmp.eq.s32.totalorder %s22, 1
      %p218 = por %p216, %p217
      %p219 = scmp.ne.s32.totalorder %s208, %s209
      %p220 = scmp.eq.s32.totalorder %s22, 0
      %p221 = por %p219, %p220
      %p222 = scmp.ne.s32.totalorder %s208, %s209
      %p223 = scmp.eq.s32.totalorder %s23, 1
      %p224 = por %p222, %p223
      %p226 = scmp.ne.s32.totalorder %s209, %s225
      %p227 = scmp.eq.s32.totalorder %s23, 0
      %p228 = por %p226, %p227
      %p229 = scmp.le.s32.totalorder 1, %s17
      %p230 = scmp.lt.s32.totalorder %s17, 3
      %p231 = pnand %p229, %p230
      %p232 = pneg %p231
      // Predicated region
      $region9: #{tpu_custom_call.1} parent=5 // pred_check
        _
      $region10: #{tpu_custom_call.1} parent=5 // pred_check_branch
        %234 = sbr.rel (%p231) target = $region12
      $region11: #{tpu_custom_call.1} parent=5 // pred_region
        %s235 = ssub.s32 %s17, 1
        // Predicated region
        $region13: #{tpu_custom_call.1} parent=11 // pred_check
          %p236 = pneg %p90
        $region14: #{tpu_custom_call.1} parent=11 // pred_check_branch
          %238 = sbr.rel (%p236) target = $region16
        $region15: #{tpu_custom_call.1} parent=11 // pred_region
          _
        $region16: #{tpu_custom_call.1} parent=11 // pred_fallthru
          _
        // Predicated region
        $region17: #{tpu_custom_call.1} parent=11 // pred_check
          %p239 = pneg %p111
        $region18: #{tpu_custom_call.1} parent=11 // pred_check_branch
          %241 = sbr.rel (%p239) target = $region20
        $region19: #{tpu_custom_call.1} parent=11 // pred_region
          _
        $region20: #{tpu_custom_call.1} parent=11 // pred_fallthru
          _
        // Predicated region
        $region21: #{tpu_custom_call.1} parent=11 // pred_check
          %p242 = pneg %p132
        $region22: #{tpu_custom_call.1} parent=11 // pred_check_branch
          %244 = sbr.rel (%p242) target = $region24
        $region23: #{tpu_custom_call.1} parent=11 // pred_region
          _
        $region24: #{tpu_custom_call.1} parent=11 // pred_fallthru
          _
        // Predicated region
        $region25: #{tpu_custom_call.1} parent=11 // pred_check
          %p245 = pneg %p153
        $region26: #{tpu_custom_call.1} parent=11 // pred_check_branch
          %247 = sbr.rel (%p245) target = $region28
        $region27: #{tpu_custom_call.1} parent=11 // pred_region
          _
        $region28: #{tpu_custom_call.1} parent=11 // pred_fallthru
          _
        // Predicated region
        $region29: #{tpu_custom_call.1} parent=11 // pred_check
          %p248 = pneg %p174
        $region30: #{tpu_custom_call.1} parent=11 // pred_check_branch
          %250 = sbr.rel (%p248) target = $region32
        $region31: #{tpu_custom_call.1} parent=11 // pred_region
          _
        $region32: #{tpu_custom_call.1} parent=11 // pred_fallthru
          _
        // Predicated region
        $region33: #{tpu_custom_call.1} parent=11 // pred_check
          %p251 = pneg %p195
        $region34: #{tpu_custom_call.1} parent=11 // pred_check_branch
          %253 = sbr.rel (%p251) target = $region36
        $region35: #{tpu_custom_call.1} parent=11 // pred_region
          _
        $region36: #{tpu_custom_call.1} parent=11 // pred_fallthru
          _
      $region12: #{tpu_custom_call.1} parent=5 // pred_fallthru
        _
      %p254 = scmp.lt.s32.totalorder %s17, 2
      // Predicated region
      $region37: #{tpu_custom_call.1} parent=5 // pred_check
        %p255 = pneg %p254
      $region38: #{tpu_custom_call.1} parent=5 // pred_check_branch
        %257 = sbr.rel (%p255) target = $region40
      $region39: #{tpu_custom_call.1} parent=5 // pred_region
        // Predicated region
        $region41: #{tpu_custom_call.1} parent=39 // pred_check
          %p258 = pneg %p37
        $region42: #{tpu_custom_call.1} parent=39 // pred_check_branch
          %260 = sbr.rel (%p258) target = $region44
        $region43: #{tpu_custom_call.1} parent=39 // pred_region
          %p261 = scmp.lt.s32.totalorder %s17, 1
          %s262 = scalar_select %p261, %s17, 1
          %s263 = smul.addr %s262, 8
          %s264 = scalar_lea.vmem %s0, %s263
        $region44: #{tpu_custom_call.1} parent=39 // pred_fallthru
          _
        // Predicated region
        $region45: #{tpu_custom_call.1} parent=39 // pred_check
          %p265 = pneg %p63
        $region46: #{tpu_custom_call.1} parent=39 // pred_check_branch
          %267 = sbr.rel (%p265) target = $region48
        $region47: #{tpu_custom_call.1} parent=39 // pred_region
          %p268 = scmp.lt.s32.totalorder %s17, 1
          %s269 = scalar_select %p268, %s17, 1
          %s270 = smul.addr %s269, 8
          %s271 = scalar_lea.vmem %s1, %s270
        $region48: #{tpu_custom_call.1} parent=39 // pred_fallthru
          _
      $region40: #{tpu_custom_call.1} parent=5 // pred_fallthru
        _
      %p272 = scmp.le.s32.totalorder 1, %s17
      %p273 = scmp.lt.s32.totalorder %s17, 3
      %p274 = pnand %p272, %p273
      %p275 = pneg %p274
      // Predicated region
      $region49: #{tpu_custom_call.1} parent=5 // pred_check
        _
      $region50: #{tpu_custom_call.1} parent=5 // pred_check_branch
        %277 = sbr.rel (%p274) target = $region52
      $region51: #{tpu_custom_call.1} parent=5 // pred_region
        %s278 = ssub.s32 %s17, 1
        %p279 = scmp.lt.s32.totalorder %s22, 1
        %s280 = scalar_select %p279, %s22, 1
        %s281 = smul.addr %s280, 8
        %s282 = scalar_lea.vmem %s0, %s281
        %p283 = pneg %p43
        %p284 = pneg %p40
        %p285 = scmp.lt.s32.totalorder %s22, 1
        %s286 = scalar_select %p285, %s22, 1
        %s287 = smul.addr %s286, 8
        %s288 = scalar_lea.vmem %s1, %s287
        %p289 = pneg %p69
        %p290 = pneg %p66
        %p291 = pneg %p90
        %p292 = pneg %p87
        %p293 = pneg %p111
        %p294 = pneg %p108
        %p295 = pneg %p132
        %p296 = pneg %p129
        %p297 = pneg %p153
        %p298 = pneg %p150
        %p299 = pneg %p174
        %p300 = pneg %p171
        %p301 = pneg %p195
        %p302 = pneg %p192
        %p303 = pneg %p221
        %p304 = pneg %p218
        %s305 = sand.u32 %s208, 1
        %s306 = scalar_lea.sflag [#allocation3], %s305
        %s307 = sand.u32 %s208, 1
        %s308 = smul.addr %s307, 8
        %s309 = scalar_lea.vmem [#allocation2], %s308
        %p310 = scmp.lt.s32.totalorder %s22, 1
        %s311 = scalar_select %p310, %s22, 1
        %s312 = smul.addr %s311, 8
        %s313 = scalar_lea.vmem %s0, %s312
        %p314 = scmp.lt.s32.totalorder %s22, 1
        %s315 = scalar_select %p314, %s22, 1
        %s316 = smul.addr %s315, 8
        %s317 = scalar_lea.vmem %s1, %s316
        %v318 = vld [vmem:[%s313] sm:$0xff]
        %v319 = vld [vmem:[%s2] sm:$0xff]
        %v320 = vld [vmem:[%s2 + $0x8] sm:$0xff]
        %v321 = vld [vmem:[%s2 + $0x10] sm:$0xff]
        %v322 = vld [vmem:[%s2 + $0x18] sm:$0xff]
        %v323 = vld [vmem:[%s2 + $0x20] sm:$0xff]
        %v324 = vld [vmem:[%s2 + $0x28] sm:$0xff]
        %v325 = vld [vmem:[%s3] sm:$0x1]
        %v327 = vlaneseq
        %v328 = vshrl.u32 %v327, 7
        %v329 = vsub.s32 0, %v328
        %v330 = vrot.slane %v325, %v329
        %vm332 = vcmask 392192
        %v334 = vsel %vm332, %v318, 0
        %336 = vmatprep.subr.mxu0 0.0
        %337 = vmatpush1.msra.mxu0 %v319
        %338 = vmatprep.subr.mxu0 0.0
        %339 = vmatpush1.msra.mxu0 %v320
        %340 = vmatprep.subr.mxu0 0.0
        %341 = vmatpush1.msra.mxu0 %v321
        %342 = vmatprep.subr.mxu0 0.0
        %343 = vmatpush1.msra.mxu0 %v322
        %344 = vmatprep.subr.mxu0 0.0
        %345 = vmatpush1.msra.mxu0 %v323
        %346 = vmatprep.subr.mxu0 0.0
        %347 = vmatpush1.msra.mxu0 %v324
        %348 = vmatprep.subr.mxu0 0.0
        %349 = vmatpush1.msra.mxu0 0.0
        %350 = vmatprep.subr.mxu0 0.0
        %351 = vmatpush1.msra.mxu0 0.0
        %352 = vmatprep.subr.mxu0 0.0
        %353 = vmatpush1.msra.mxu0 0.0
        %354 = vmatprep.subr.mxu0 0.0
        %355 = vmatpush1.msra.mxu0 0.0
        %356 = vmatprep.subr.mxu0 0.0
        %357 = vmatpush1.msra.mxu0 0.0
        %358 = vmatprep.subr.mxu0 0.0
        %359 = vmatpush1.msra.mxu0 0.0
        %360 = vmatprep.subr.mxu0 0.0
        %361 = vmatpush1.msra.mxu0 0.0
        %362 = vmatprep.subr.mxu0 0.0
        %363 = vmatpush1.msra.mxu0 0.0
        %364 = vmatprep.subr.mxu0 0.0
        %365 = vmatpush1.msra.mxu0 0.0
        %366 = vmatprep.subr.mxu0 0.0
        %367 = vmatpush1.msra.mxu0 0.0
        %368 = vmatprep.subr.mxu0 0.0
        %369 = vmatpush1.msra.mxu0 0.0
        %370 = vmatprep.subr.mxu0 0.0
        %371 = vmatpush1.msra.mxu0 0.0
        %372 = vmatprep.subr.mxu0 0.0
        %373 = vmatpush1.msra.mxu0 0.0
        %374 = vmatprep.subr.mxu0 0.0
        %375 = vmatpush1.msra.mxu0 0.0
        %376 = vmatprep.subr.mxu0 0.0
        %377 = vmatpush1.msra.mxu0 0.0
        %378 = vmatprep.subr.mxu0 0.0
        %379 = vmatpush1.msra.mxu0 0.0
        %380 = vmatprep.subr.mxu0 0.0
        %381 = vmatpush1.msra.mxu0 0.0
        %382 = vmatprep.subr.mxu0 0.0
        %383 = vmatpush1.msra.mxu0 0.0
        %384 = vmatprep.subr.mxu0 0.0
        %385 = vmatpush1.msra.mxu0 0.0
        %386 = vmatprep.subr.mxu0 0.0
        %387 = vmatpush1.msra.mxu0 0.0
        %388 = vmatprep.subr.mxu0 0.0
        %389 = vmatpush1.msra.mxu0 0.0
        %390 = vmatprep.subr.mxu0 0.0
        %391 = vmatpush1.msra.mxu0 0.0
        %392 = vmatprep.subr.mxu0 0.0
        %393 = vmatpush1.msra.mxu0 0.0
        %394 = vmatprep.subr.mxu0 0.0
        %395 = vmatpush1.msra.mxu0 0.0
        %396 = vmatprep.subr.mxu0 0.0
        %397 = vmatpush1.msra.mxu0 0.0
        %398 = vmatprep.subr.mxu0 0.0
        %399 = vmatpush1.msra.mxu0 0.0
        %400 = vmatprep.mubr.f32.mxu0 0.0
        %401 = vmatmul.mubr.f32.gmra.mrb[0].mxu0 %v334
        %v402 = vpop.f32.mrb[0].mxu0
        %v403 = vadd.f32 %v330, %v402
        %v404 = vpop.f32.mrb[0].mxu0
        %405 = vdwg.mxu0
        %v406 = vmul.f32 %v403, 0.5
        %v407 = vmul.f32 %v403, 0.70710677
        %v408 = verf.f32.pop %v407
        %v409 = vadd.f32 %v408, 1.0
        %v410 = vmul.f32 %v406, %v409
        %v411 = vld [vmem:[%s4] sm:$0xff]
        %v412 = vld [vmem:[%s4 + $0x8] sm:$0xff]
        %v413 = vld [vmem:[%s4 + $0x10] sm:$0xff]
        %v414 = vld [vmem:[%s4 + $0x18] sm:$0xff]
        %v415 = vld [vmem:[%s4 + $0x20] sm:$0xff]
        %v416 = vld [vmem:[%s4 + $0x28] sm:$0xff]
        %v417 = vld [vmem:[%s4 + $0x30] sm:$0xff]
        %v418 = vld [vmem:[%s4 + $0x38] sm:$0xff]
        %v419 = vld [vmem:[%s4 + $0x40] sm:$0xff]
        %v420 = vld [vmem:[%s4 + $0x48] sm:$0xff]
        %v421 = vld [vmem:[%s4 + $0x50] sm:$0xff]
        %v422 = vld [vmem:[%s4 + $0x58] sm:$0xff]
        %v423 = vld [vmem:[%s4 + $0x60] sm:$0xff]
        %v424 = vld [vmem:[%s4 + $0x68] sm:$0xff]
        %v425 = vld [vmem:[%s4 + $0x70] sm:$0xff]
        %v426 = vld [vmem:[%s4 + $0x78] sm:$0xff]
        %v427 = vld [vmem:[%s5] sm:$0x1]
        %v429 = vlaneseq
        %v430 = vshrl.u32 %v429, 7
        %v431 = vsub.s32 0, %v430
        %v432 = vrot.slane %v427, %v431
        %434 = vmatprep.subr.mxu0 0.0
        %435 = vmatpush1.msra.mxu0 %v411
        %436 = vmatprep.subr.mxu0 0.0
        %437 = vmatpush1.msra.mxu0 %v412
        %438 = vmatprep.subr.mxu0 0.0
        %439 = vmatpush1.msra.mxu0 %v413
        %440 = vmatprep.subr.mxu0 0.0
        %441 = vmatpush1.msra.mxu0 %v414
        %442 = vmatprep.subr.mxu0 0.0
        %443 = vmatpush1.msra.mxu0 %v415
        %444 = vmatprep.subr.mxu0 0.0
        %445 = vmatpush1.msra.mxu0 %v416
        %446 = vmatprep.subr.mxu0 0.0
        %447 = vmatpush1.msra.mxu0 %v417
        %448 = vmatprep.subr.mxu0 0.0
        %449 = vmatpush1.msra.mxu0 %v418
        %450 = vmatprep.subr.mxu0 0.0
        %451 = vmatpush1.msra.mxu0 %v419
        %452 = vmatprep.subr.mxu0 0.0
        %453 = vmatpush1.msra.mxu0 %v420
        %454 = vmatprep.subr.mxu0 0.0
        %455 = vmatpush1.msra.mxu0 %v421
        %456 = vmatprep.subr.mxu0 0.0
        %457 = vmatpush1.msra.mxu0 %v422
        %458 = vmatprep.subr.mxu0 0.0
        %459 = vmatpush1.msra.mxu0 %v423
        %460 = vmatprep.subr.mxu0 0.0
        %461 = vmatpush1.msra.mxu0 %v424
        %462 = vmatprep.subr.mxu0 0.0
        %463 = vmatpush1.msra.mxu0 %v425
        %464 = vmatprep.subr.mxu0 0.0
        %465 = vmatpush1.msra.mxu0 %v426
        %466 = vmatprep.subr.mxu0 0.0
        %467 = vmatpush1.msra.mxu0 0.0
        %468 = vmatprep.subr.mxu0 0.0
        %469 = vmatpush1.msra.mxu0 0.0
        %470 = vmatprep.subr.mxu0 0.0
        %471 = vmatpush1.msra.mxu0 0.0
        %472 = vmatprep.subr.mxu0 0.0
        %473 = vmatpush1.msra.mxu0 0.0
        %474 = vmatprep.subr.mxu0 0.0
        %475 = vmatpush1.msra.mxu0 0.0
        %476 = vmatprep.subr.mxu0 0.0
        %477 = vmatpush1.msra.mxu0 0.0
        %478 = vmatprep.subr.mxu0 0.0
        %479 = vmatpush1.msra.mxu0 0.0
        %480 = vmatprep.subr.mxu0 0.0
        %481 = vmatpush1.msra.mxu0 0.0
        %482 = vmatprep.subr.mxu0 0.0
        %483 = vmatpush1.msra.mxu0 0.0
        %484 = vmatprep.subr.mxu0 0.0
        %485 = vmatpush1.msra.mxu0 0.0
        %486 = vmatprep.subr.mxu0 0.0
        %487 = vmatpush1.msra.mxu0 0.0
        %488 = vmatprep.subr.mxu0 0.0
        %489 = vmatpush1.msra.mxu0 0.0
        %490 = vmatprep.subr.mxu0 0.0
        %491 = vmatpush1.msra.mxu0 0.0
        %492 = vmatprep.subr.mxu0 0.0
        %493 = vmatpush1.msra.mxu0 0.0
        %494 = vmatprep.subr.mxu0 0.0
        %495 = vmatpush1.msra.mxu0 0.0
        %496 = vmatprep.subr.mxu0 0.0
        %497 = vmatpush1.msra.mxu0 0.0
        %498 = vmatprep.mubr.f32.mxu0 0.0
        %499 = vmatmul.mubr.f32.gmra.mrb[0].mxu0 %v410
        %v500 = vpop.f32.mrb[0].mxu0
        %v501 = vadd.f32 %v432, %v500
        %v502 = vpop.f32.mrb[0].mxu0
        %503 = vdwg.mxu0
        %v504 = vld [vmem:[%s317] sm:$0xff]
        %v505 = vadd.f32 %v501, %v504
        %vm506 = vcmask 261120
        %v507 = vsel %vm506, %v505, 0.0
        %508 = vadd.xlane.f32.xlu0 %v507
        %v509 = vpop.xlane.xlu0 %508
        %v510 = vmul.f32 %v509, 0.03125
        %v511 = vsub.f32 %v505, %v510
        %v512 = vmul.f32 %v511, %v511
        %v513 = vsel %vm506, %v512, 0.0
        %514 = vadd.xlane.f32.xlu0 %v513
        %v515 = vpop.xlane.xlu0 %514
        %v516 = vmul.f32 %v515, 0.03125
        %v517 = vadd.f32 %v516, 1e-05
        %v518 = vrsqrt.pop %v517
        %v519 = vmul.f32 %v511, %v518
        %v520 = vld [vmem:[%s6] sm:$0x1]
        %v522 = vlaneseq
        %v523 = vshrl.u32 %v522, 7
        %v524 = vsub.s32 0, %v523
        %v525 = vrot.slane %v520, %v524
        %v527 = vmul.f32 %v519, %v525
        %v528 = vld [vmem:[%s7] sm:$0x1]
        %v530 = vlaneseq
        %v531 = vshrl.u32 %v530, 7
        %v532 = vsub.s32 0, %v531
        %v533 = vrot.slane %v528, %v532
        %v535 = vadd.f32 %v527, %v533
        %536 = vst.msk [vmem:[%s309] sm:$0xff] %vm506, %v535
        %s537 = sand.u32 %s208, 1
        %s538 = scalar_lea.sflag [#allocation3], %s537
        %s539 = sand.u32 %s208, 1
        %s540 = smul.addr %s539, 8
        %s541 = scalar_lea.vmem [#allocation2], %s540
        // Predicated region
        $region53: #{tpu_custom_call.1} parent=51 // pred_check
          %p542 = pneg %p218
        $region54: #{tpu_custom_call.1} parent=51 // pred_check_branch
          %544 = sbr.rel (%p542) target = $region56
        $region55: #{tpu_custom_call.1} parent=51 // pred_region
          %s546 = ssub.s32 128, 128
          %547 = vsyncadd %s538, %s546
          %s548 = smul.addr %s22, 128
          %s549 = scalar_lea.hbm %s8, %s548
          %s551 = sshll.u32 %s541, 4
          %s552 = int_to_ptr.vmem [resolvable:$true] %s551
          %554 = dma.vmem_to_hbm [thread:$0]  %s552, 128, %s549, %s538
        $region56: #{tpu_custom_call.1} parent=51 // pred_fallthru
          _
      $region52: #{tpu_custom_call.1} parent=5 // pred_fallthru
        _
      %p555 = scmp.le.s32.totalorder 2, %s17
      // Predicated region
      $region57: #{tpu_custom_call.1} parent=5 // pred_check
        %p556 = pneg %p555
      $region58: #{tpu_custom_call.1} parent=5 // pred_check_branch
        %558 = sbr.rel (%p556) target = $region60
      $region59: #{tpu_custom_call.1} parent=5 // pred_region
        %s559 = ssub.s32 %s17, 2
        // Predicated region
        $region61: #{tpu_custom_call.1} parent=59 // pred_check
          %p560 = pneg %p224
        $region62: #{tpu_custom_call.1} parent=59 // pred_check_branch
          %562 = sbr.rel (%p560) target = $region64
        $region63: #{tpu_custom_call.1} parent=59 // pred_region
          %s563 = sand.u32 %s209, 1
          %s564 = scalar_lea.sflag [#allocation3], %s563
          %s565 = sand.u32 %s209, 1
          %s566 = smul.addr %s565, 8
          %s567 = scalar_lea.vmem [#allocation2], %s566
          %568 = dma.done %s564, 128
        $region64: #{tpu_custom_call.1} parent=59 // pred_fallthru
          _
      $region60: #{tpu_custom_call.1} parent=5 // pred_fallthru
        _
    $region6: #{tpu_custom_call.1} parent=1 // loop_footer
      %s21 = sadd.s32 1, %s17
    $region7: #{tpu_custom_call.1} parent=1 // loop_footer_branch
      %16 = sbr.rel target = $region3
    $region8: #{tpu_custom_call.1} parent=1 // loop_exit
      _
    %569 = vsyncpa [#allocation3], 1
    %s570 = scalar_lea.sflag [#allocation3], 1
    %571 = vsyncpa %s570, 1

</llo_original>
